<compile_context>
chip_gen: v6e
topology: v6e:2x2x1
jax: 0.10.0
libtpu: 0.0.40
codegen_flags: <defaults>
</compile_context>

<pallas_src>
import functools

import jax
import jax.numpy as jnp
from jax.experimental import pallas as pl
from jax.experimental.pallas import tpu as pltpu

_EPS = 1e-6  # torch.pairwise_distance default eps


def _pnorm(diff, p_norm):
    """p-norm along the last axis (keepdims); `diff` already includes the +eps term."""
    if p_norm == 1:
        return jnp.sum(jnp.abs(diff), axis=-1, keepdims=True)
    if p_norm == 2:
        # |x|^2 == x^2 (matches torch.pairwise_distance).
        return jnp.sqrt(jnp.sum(diff * diff, axis=-1, keepdims=True))
    if p_norm == 3:
        a = jnp.abs(diff)
        s = jnp.sum(a * a * a, axis=-1, keepdims=True)
        return jnp.power(s, jnp.float32(1.0 / 3.0))
    if p_norm == 4:
        sq = diff * diff
        s = jnp.sum(sq * sq, axis=-1, keepdims=True)
        return jnp.sqrt(jnp.sqrt(s))
    # TODO(synk): arbitrary-p path is EUP-bound (pow = log+exp per coordinate).
    pf = jnp.float32(p_norm)
    return jnp.power(jnp.sum(jnp.power(jnp.abs(diff), pf), axis=-1, keepdims=True), 1.0 / pf)


def _align_loss_kernel(sr_ref, tg_ref, out_ref, acc_ref, *,
                       margin, p_norm, batch, emb_dim, tile_b, tiles_per_shard):
    shard = pl.program_id(0)   # 'parallel' axis (2 TCs on v7x)
    t = pl.program_id(1)       # 'arbitrary' reduction axis over row tiles

    @pl.when(t == 0)
    def _():
        acc_ref[...] = jnp.zeros_like(acc_ref)

    d = emb_dim
    # Static ref slices are zero-cost views; cast to f32 in-register, one half at a time.
    sr_true = sr_ref[:, pl.ds(0, d)].astype(jnp.float32)
    sr_nega = sr_ref[:, pl.ds(d, d)].astype(jnp.float32)
    tg_true = tg_ref[:, pl.ds(0, d)].astype(jnp.float32)
    tg_nega = tg_ref[:, pl.ds(d, d)].astype(jnp.float32)

    eps = jnp.float32(_EPS)
    m = jnp.float32(margin)

    # Shared anchor/positive diff (exact torch semantics):
    #   half1: anchor=sr_true, positive=tg_true -> sr_true - tg_true + eps =  dst + eps
    #   half2: anchor=tg_true, positive=sr_true -> tg_true - sr_true + eps =  eps - dst
    dst = sr_true - tg_true
    d_ap1 = _pnorm(dst + eps, p_norm)
    d_ap2 = _pnorm(eps - dst, p_norm)
    d_an1 = _pnorm(sr_true - tg_nega + eps, p_norm)   # half1 negative = tg_nega
    d_an2 = _pnorm(tg_true - sr_nega + eps, p_norm)   # half2 negative = sr_nega

    loss = (jnp.maximum(d_ap1 - d_an1 + m, 0.0)
            + jnp.maximum(d_ap2 - d_an2 + m, 0.0))    # [tile_b, 1]

    # Mask rows past the real batch: covers the ragged last tile AND overflow grid steps whose
    # block index was clamped in the index_map. The UNclamped tile index is used here, so any
    # clamped duplicate lands entirely past `batch` and contributes exactly zero.
    row0 = (shard * tiles_per_shard + t) * tile_b
    rows = row0 + jax.lax.broadcasted_iota(jnp.int32, (tile_b, 1), 0)
    acc_ref[...] += jnp.sum(jnp.where(rows < batch, loss, 0.0), axis=0, keepdims=True)

    @pl.when(t == tiles_per_shard - 1)
    def _():
        # reduction='mean' over the 2*batch triplets; each shard emits its partial mean.
        out_ref[...] = acc_ref[...] * jnp.float32(1.0 / (2.0 * batch))


def align_loss(repre_sr, repre_tg, *, margin=1.0, p=2, _tile_rows_override=None):
    """JAX/Pallas equivalent of AlignLoss(margin, p, reduction='mean').forward."""
    assert repre_sr.ndim == 3 and repre_sr.shape[1] == 2
    assert repre_sr.shape == repre_tg.shape
    assert repre_sr.dtype == repre_tg.dtype
    B, _, D = repre_sr.shape

    # Free contiguous reshape (no HBM copy): [B,2,D] -> [B, 2D] = [true | nega].
    sr2 = repre_sr.reshape(B, 2 * D)
    tg2 = repre_tg.reshape(B, 2 * D)

    itemsize = jnp.dtype(repre_sr.dtype).itemsize
    sublane = max(8, 32 // max(itemsize, 1))          # 8 f32 / 16 bf16 / 32 int8-fp8
    bytes_per_row = 2 * D * itemsize

    # ~4 MiB of HBM->VMEM DMA per input per grid step amortizes the ~0.35 us step overhead to
    # <10% across v5e/v6e/v7x. (No fixed row cap; the byte target governs.)
    target_bytes = 4 * 1024 * 1024
    tile_b = max(sublane, target_bytes // max(bytes_per_row, 1))
    if _tile_rows_override is not None:               # test hook: force tiling on tiny inputs
        tile_b = int(_tile_rows_override)
    if tile_b >= B:
        tile_b = B                                    # single full-extent block (always legal)
    else:
        tile_b = max(sublane, tile_b - tile_b % sublane)

    n_tiles = -(-B // tile_b)
    num_shards = 2 if n_tiles >= 2 else 1             # leading 'parallel' axis
    tiles_per_shard = -(-n_tiles // num_shards)

    kernel = functools.partial(
        _align_loss_kernel,
        margin=float(margin), p_norm=int(p), batch=int(B), emb_dim=int(D),
        tile_b=int(tile_b), tiles_per_shard=int(tiles_per_shard))

    block = (tile_b, 2 * D)
    last_tile = n_tiles - 1
    # Clamp so ragged/overflow grid steps never index past the array (no wrapper-side jnp.pad).
    in_map = lambda s, t: (jnp.minimum(s * tiles_per_shard + t, last_tile), 0)

    cost = pl.CostEstimate(
        flops=12 * B * D,
        transcendentals=0 if int(p) in (1, 2, 4) else 8 * B * D,
        bytes_accessed=2 * B * 2 * D * itemsize + 4 * num_shards)

    # 2 inputs x 2 pipeline buffers x tile + slack; >=32 MiB so v5e's 16 MiB default never trips.
    vmem_limit = int(max(32 * 1024 * 1024, 5 * tile_b * bytes_per_row))

    partials = pl.pallas_call(
        kernel,
        out_shape=jax.ShapeDtypeStruct((num_shards, 1), jnp.float32),
        grid=(num_shards, tiles_per_shard),
        in_specs=[pl.BlockSpec(block, in_map),
                  pl.BlockSpec(block, in_map)],
        out_specs=pl.BlockSpec((1, 1), lambda s, t: (s, 0)),
        scratch_shapes=[pltpu.VMEM((1, 1), jnp.float32)],
        compiler_params=pltpu.CompilerParams(
            # TODO(synk): on v7x verify axis 0 actually lands on both TensorCores (xprof);
            # if not, switch the shard axis to pltpu.CORE_PARALLEL.
            dimension_semantics=("parallel", "arbitrary"),
            vmem_limit_bytes=vmem_limit),
        cost_estimate=cost,
    )(sr2, tg2)

    # Each shard already applied the 1/(2B) factor; summing partials gives the mean.
    return jnp.sum(partials)


def _reference_align_loss(repre_sr, repre_tg, margin=1.0, p=2):
    """Pure-JAX reference (mirrors the PyTorch module) for correctness check."""
    sr_true, sr_nega = repre_sr[:, 0, :], repre_sr[:, 1, :]
    tg_true, tg_nega = repre_tg[:, 0, :], repre_tg[:, 1, :]
    a = jnp.concatenate([sr_true, tg_true], axis=0)
    po = jnp.concatenate([tg_true, sr_true], axis=0)
    ne = jnp.concatenate([tg_nega, sr_nega], axis=0)
    d_ap = jnp.power(jnp.sum(jnp.power(jnp.abs(a - po + _EPS), p), axis=-1), 1.0 / p)
    d_an = jnp.power(jnp.sum(jnp.power(jnp.abs(a - ne + _EPS), p), axis=-1), 1.0 / p)
    return jnp.mean(jnp.maximum(d_ap - d_an + margin, 0.0))


if __name__ == "__main__":
    # Deterministic small inputs consistent with the module's forward:
    # score shape [batch_size, 2, embedding_dim]
    key = jax.random.PRNGKey(0)
    margin = 1.0

    # Case 1: tiny batch, single full-extent block.
    k_sr, k_tg = jax.random.split(key)
    B, D = 2, 32
    repre_sr = jax.random.normal(k_sr, (B, 2, D), dtype=jnp.float32)
    repre_tg = jax.random.normal(k_tg, (B, 2, D), dtype=jnp.float32)
    loss = jax.block_until_ready(align_loss(repre_sr, repre_tg, margin=margin, p=2))
    ref = jax.block_until_ready(_reference_align_loss(repre_sr, repre_tg, margin=margin, p=2))
    assert jnp.allclose(loss, ref, atol=1e-5, rtol=1e-5), (loss, ref)

    # Case 2: ragged last tile (B not a multiple of tile_b), two shards.
    k_sr, k_tg = jax.random.split(jax.random.PRNGKey(1))
    B2 = 13
    sr2 = jax.random.normal(k_sr, (B2, 2, D), dtype=jnp.float32)
    tg2 = jax.random.normal(k_tg, (B2, 2, D), dtype=jnp.float32)
    loss2 = jax.block_until_ready(
        align_loss(sr2, tg2, margin=margin, p=2, _tile_rows_override=8))
    ref2 = jax.block_until_ready(_reference_align_loss(sr2, tg2, margin=margin, p=2))
    assert jnp.allclose(loss2, ref2, atol=1e-5, rtol=1e-5), (loss2, ref2)

    # Case 3: odd tile count -> exercises the clamped/overflow grid-step path.
    k_sr, k_tg = jax.random.split(jax.random.PRNGKey(2))
    B3 = 20
    sr3 = jax.random.normal(k_sr, (B3, 2, D), dtype=jnp.float32)
    tg3 = jax.random.normal(k_tg, (B3, 2, D), dtype=jnp.float32)
    loss3 = jax.block_until_ready(
        align_loss(sr3, tg3, margin=margin, p=2, _tile_rows_override=8))
    ref3 = jax.block_until_ready(_reference_align_loss(sr3, tg3, margin=margin, p=2))
    assert jnp.allclose(loss3, ref3, atol=1e-5, rtol=1e-5), (loss3, ref3)

    print("KERNEL_OK")
</pallas_src>

<mosaic_0001>
module attributes {stable_mosaic.version = 11 : i64} {
  func.func @_align_loss_kernel(%arg0: i32, %arg1: i32, %arg2: memref<2x64xf32, #tpu.memory_space<vmem>>, %arg3: memref<2x64xf32, #tpu.memory_space<vmem>>, %arg4: memref<1x1xf32, #tpu.memory_space<vmem>>, %arg5: memref<1x1xf32, #tpu.memory_space<vmem>>) attributes {dimension_semantics = [#tpu.dimension_semantics<parallel>, #tpu.dimension_semantics<arbitrary>], iteration_bounds = array<i64: 1, 1>, scalar_prefetch = 0 : i64, scratch_operands = 1 : i64, tpu.core_type = #tpu.core_type<tc>, window_params = [{transform_indices = @transform_0, window_bounds = array<i64: 2, 64>}, {transform_indices = @transform_1, window_bounds = array<i64: 2, 64>}, {transform_indices = @transform_2, window_bounds = array<i64: 1, 1>}]} {
    %c0_i32 = arith.constant 0 : i32
    %0 = arith.cmpi eq, %arg1, %c0_i32 : i32
    %1 = arith.extui %0 : i1 to i32
    %c0_i32_0 = arith.constant 0 : i32
    %2 = arith.cmpi ne, %1, %c0_i32_0 : i32
    scf.if %2 {
      %cst_27 = arith.constant 0.000000e+00 : f32
      %63 = vector.broadcast %cst_27 : f32 to vector<1x1xf32>
      %c0_28 = arith.constant 0 : index
      %c0_29 = arith.constant 0 : index
      %64 = vector.load %arg5[%c0_28, %c0_29] : memref<1x1xf32, #tpu.memory_space<vmem>>, vector<1x1xf32>
      tpu.vector_store %arg5[%c0_28, %c0_29], %63 {strides = array<i32>} : memref<1x1xf32, #tpu.memory_space<vmem>>, vector<1x1xf32>,
    } else {
    }
    %c0 = arith.constant 0 : index
    %c0_1 = arith.constant 0 : index
    %3 = vector.load %arg2[%c0, %c0_1] : memref<2x64xf32, #tpu.memory_space<vmem>>, vector<2x32xf32>
    %c0_2 = arith.constant 0 : index
    %c32 = arith.constant 32 : index
    %4 = vector.load %arg2[%c0_2, %c32] : memref<2x64xf32, #tpu.memory_space<vmem>>, vector<2x32xf32>
    %c0_3 = arith.constant 0 : index
    %c0_4 = arith.constant 0 : index
    %5 = vector.load %arg3[%c0_3, %c0_4] : memref<2x64xf32, #tpu.memory_space<vmem>>, vector<2x32xf32>
    %c0_5 = arith.constant 0 : index
    %c32_6 = arith.constant 32 : index
    %6 = vector.load %arg3[%c0_5, %c32_6] : memref<2x64xf32, #tpu.memory_space<vmem>>, vector<2x32xf32>
    %7 = arith.subf %3, %5 : vector<2x32xf32>
    %cst = arith.constant 9.99999997E-7 : f32
    %8 = vector.broadcast %cst : f32 to vector<2x32xf32>
    %9 = arith.addf %7, %8 : vector<2x32xf32>
    %10 = arith.mulf %9, %9 : vector<2x32xf32>
    %cst_7 = arith.constant dense<0.000000e+00> : vector<2xf32>
    %11 = vector.multi_reduction <add>, %10, %cst_7 [1] : vector<2x32xf32> to vector<2xf32>
    %12 = vector.shape_cast %11 : vector<2xf32> to vector<2x1xf32>
    %13 = math.sqrt %12 : vector<2x1xf32>
    %cst_8 = arith.constant 9.99999997E-7 : f32
    %14 = vector.broadcast %cst_8 : f32 to vector<2x32xf32>
    %15 = arith.subf %14, %7 : vector<2x32xf32>
    %16 = arith.mulf %15, %15 : vector<2x32xf32>
    %cst_9 = arith.constant dense<0.000000e+00> : vector<2xf32>
    %17 = vector.multi_reduction <add>, %16, %cst_9 [1] : vector<2x32xf32> to vector<2xf32>
    %18 = vector.shape_cast %17 : vector<2xf32> to vector<2x1xf32>
    %19 = math.sqrt %18 : vector<2x1xf32>
    %20 = arith.subf %3, %6 : vector<2x32xf32>
    %cst_10 = arith.constant 9.99999997E-7 : f32
    %21 = vector.broadcast %cst_10 : f32 to vector<2x32xf32>
    %22 = arith.addf %20, %21 : vector<2x32xf32>
    %23 = arith.mulf %22, %22 : vector<2x32xf32>
    %cst_11 = arith.constant dense<0.000000e+00> : vector<2xf32>
    %24 = vector.multi_reduction <add>, %23, %cst_11 [1] : vector<2x32xf32> to vector<2xf32>
    %25 = vector.shape_cast %24 : vector<2xf32> to vector<2x1xf32>
    %26 = math.sqrt %25 : vector<2x1xf32>
    %27 = arith.subf %5, %4 : vector<2x32xf32>
    %cst_12 = arith.constant 9.99999997E-7 : f32
    %28 = vector.broadcast %cst_12 : f32 to vector<2x32xf32>
    %29 = arith.addf %27, %28 : vector<2x32xf32>
    %30 = arith.mulf %29, %29 : vector<2x32xf32>
    %cst_13 = arith.constant dense<0.000000e+00> : vector<2xf32>
    %31 = vector.multi_reduction <add>, %30, %cst_13 [1] : vector<2x32xf32> to vector<2xf32>
    %32 = vector.shape_cast %31 : vector<2xf32> to vector<2x1xf32>
    %33 = math.sqrt %32 : vector<2x1xf32>
    %34 = arith.subf %13, %26 : vector<2x1xf32>
    %cst_14 = arith.constant 1.000000e+00 : f32
    %35 = vector.broadcast %cst_14 : f32 to vector<2x1xf32>
    %36 = arith.addf %34, %35 : vector<2x1xf32>
    %cst_15 = arith.constant 0.000000e+00 : f32
    %37 = vector.broadcast %cst_15 : f32 to vector<2x1xf32>
    %38 = arith.maximumf %36, %37 : vector<2x1xf32>
    %39 = arith.subf %19, %33 : vector<2x1xf32>
    %cst_16 = arith.constant 1.000000e+00 : f32
    %40 = vector.broadcast %cst_16 : f32 to vector<2x1xf32>
    %41 = arith.addf %39, %40 : vector<2x1xf32>
    %cst_17 = arith.constant 0.000000e+00 : f32
    %42 = vector.broadcast %cst_17 : f32 to vector<2x1xf32>
    %43 = arith.maximumf %41, %42 : vector<2x1xf32>
    %44 = arith.addf %38, %43 : vector<2x1xf32>
    %c1_i32 = arith.constant 1 : i32
    %45 = arith.muli %arg0, %c1_i32 : i32
    %46 = arith.addi %45, %arg1 : i32
    %c2_i32 = arith.constant 2 : i32
    %47 = arith.muli %46, %c2_i32 : i32
    %48 = tpu.iota {dimensions = array<i32: 0>} : vector<2x1xi32>
    %49 = vector.broadcast %47 : i32 to vector<2x1xi32>
    %50 = arith.addi %49, %48 : vector<2x1xi32>
    %c0_18 = arith.constant 0 : index
    %c0_19 = arith.constant 0 : index
    %51 = vector.load %arg5[%c0_18, %c0_19] : memref<1x1xf32, #tpu.memory_space<vmem>>, vector<1x1xf32>
    %c2_i32_20 = arith.constant 2 : i32
    %52 = vector.broadcast %c2_i32_20 : i32 to vector<2x1xi32>
    %53 = arith.cmpi slt, %50, %52 : vector<2x1xi32>
    %cst_21 = arith.constant 0.000000e+00 : f32
    %54 = vector.broadcast %cst_21 : f32 to vector<2x1xf32>
    %55 = arith.select %53, %44, %54 : vector<2x1xi1>, vector<2x1xf32>
    %cst_22 = arith.constant dense<0.000000e+00> : vector<1xf32>
    %56 = vector.multi_reduction <add>, %55, %cst_22 [0] : vector<2x1xf32> to vector<1xf32>
    %57 = vector.shape_cast %56 : vector<1xf32> to vector<1x1xf32>
    %58 = arith.addf %51, %57 : vector<1x1xf32>
    %c0_23 = arith.constant 0 : index
    %c0_24 = arith.constant 0 : index
    %59 = vector.load %arg5[%c0_23, %c0_24] : memref<1x1xf32, #tpu.memory_space<vmem>>, vector<1x1xf32>
    tpu.vector_store %arg5[%c0_23, %c0_24], %58 {strides = array<i32>} : memref<1x1xf32, #tpu.memory_space<vmem>>, vector<1x1xf32>,
    %c0_i32_25 = arith.constant 0 : i32
    %60 = arith.cmpi eq, %arg1, %c0_i32_25 : i32
    %61 = arith.extui %60 : i1 to i32
    %c0_i32_26 = arith.constant 0 : i32
    %62 = arith.cmpi ne, %61, %c0_i32_26 : i32
    scf.if %62 {
      %c0_27 = arith.constant 0 : index
      %c0_28 = arith.constant 0 : index
      %63 = vector.load %arg5[%c0_27, %c0_28] : memref<1x1xf32, #tpu.memory_space<vmem>>, vector<1x1xf32>
      %cst_29 = arith.constant 2.500000e-01 : f32
      %64 = vector.broadcast %cst_29 : f32 to vector<1x1xf32>
      %65 = arith.mulf %63, %64 : vector<1x1xf32>
      %c0_30 = arith.constant 0 : index
      %c0_31 = arith.constant 0 : index
      %66 = vector.load %arg4[%c0_30, %c0_31] : memref<1x1xf32, #tpu.memory_space<vmem>>, vector<1x1xf32>
      tpu.vector_store %arg4[%c0_30, %c0_31], %65 {strides = array<i32>} : memref<1x1xf32, #tpu.memory_space<vmem>>, vector<1x1xf32>,
    } else {
    }
    return
  }
  func.func @transform_0(%arg0: i32, %arg1: i32) -> (i32, i32) {
    %c1_i32 = arith.constant 1 : i32
    %0 = arith.muli %arg0, %c1_i32 : i32
    %1 = arith.addi %0, %arg1 : i32
    %c0_i32 = arith.constant 0 : i32
    %2 = arith.minsi %1, %c0_i32 : i32
    %c0_i32_0 = arith.constant 0 : i32
    %c0_i32_1 = arith.constant 0 : i32
    return %2, %c0_i32_0 : i32, i32
  }
  func.func @transform_1(%arg0: i32, %arg1: i32) -> (i32, i32) {
    %c1_i32 = arith.constant 1 : i32
    %0 = arith.muli %arg0, %c1_i32 : i32
    %1 = arith.addi %0, %arg1 : i32
    %c0_i32 = arith.constant 0 : i32
    %2 = arith.minsi %1, %c0_i32 : i32
    %c0_i32_0 = arith.constant 0 : i32
    %c0_i32_1 = arith.constant 0 : i32
    return %2, %c0_i32_0 : i32, i32
  }
  func.func @transform_2(%arg0: i32, %arg1: i32) -> (i32, i32) {
    %c0_i32 = arith.constant 0 : i32
    %c0_i32_0 = arith.constant 0 : i32
    return %arg0, %c0_i32 : i32, i32
  }
}

</mosaic_0001>

<llo_original>
// kernel: tpu_custom_call.1
$region0: #{tpu_custom_call.1}
  #allocation0 [shape = 'u32[]', space=smem, size = 0x4, offset = 0x4, fixed_abs, tag = 'smem constant byte address 0x4 - core index']
  #allocation1 [shape = 'u32[144,128]{1,0:T(1,128)}', space=vmem, size = 0x12000, scoped, tag = 'internal scratch']
  #allocation2 [shape = 'f32[1,1]{1,0:T(1,128)}', space=vmem, size = 0x200, scoped, tag = 'scratch operand']
  %s0 = inlined_call_operand.hbm [shape: f32[2,64], index: 0, kind: input, shape index: {}]
  %s1 = inlined_call_operand.hbm [shape: f32[2,64], index: 1, kind: input, shape index: {}]
  %s2 = inlined_call_operand.hbm [shape: f32[1,1], index: 2, kind: output, shape index: {}]
  %s3 = sld [smem:[#allocation0]]
  $region34: #{tpu_custom_call.1} parent=0
    _
  %s5 = ssub.s32 1, %s3
  %s6 = scalar_select 0, %s5, %s3
  $region1: #{tpu_custom_call.1} parent=0
    #allocation3 [shape = 'u8[1024]{0}', space=vmem, size = 0x400, scoped, tag = 'input window, operand 0, single buffered']
    #allocation4 [shape = 's32[1]{0}', space=sflag, size = 0x4, scoped, tag = 'scoped memory for tpu_custom_call.1']
    #allocation5 [shape = 's32[1]{0}', space=sflag, size = 0x4, scoped, tag = 'scoped memory for tpu_custom_call.1']
    #allocation6 [shape = 'u8[1024]{0}', space=vmem, size = 0x400, scoped, tag = 'input window, operand 1, single buffered']
    #allocation7 [shape = 's32[1]{0}', space=sflag, size = 0x4, scoped, tag = 'scoped memory for tpu_custom_call.1']
    #allocation8 [shape = 'u8[512]{0}', space=vmem, size = 0x400, scoped, tag = 'output window, operand 0, single buffered']
    %7 = vsyncpa [#allocation4], 0
    %8 = vsyncpa [#allocation7], 0
    %9 = vsyncpa [#allocation5], 0
    // Predicated region
    $region2: #{tpu_custom_call.1} parent=1 // pred_check
      _
    $region3: #{tpu_custom_call.1} parent=1 // pred_check_branch
      %11 = sbr.rel (0) target = $region5
    $region4: #{tpu_custom_call.1} parent=1 // pred_region
      %s12 = sadd.s32 0, 0
      %p13 = scmp.lt.s32.totalorder %s12, 0
      %s14 = scalar_select %p13, %s12, 0
      %s16 = ssub.s32 32, 32
      %17 = vsyncadd [#allocation4], %s16
      %s18 = smul.addr %s14, 32
      %s19 = scalar_lea.hbm %s0, %s18
      %s21 = sshll.u32 [#allocation3], 4
      %s22 = int_to_ptr.vmem [resolvable:$true] %s21
      %24 = dma.hbm_to_vmem [thread:$0]  %s19, 32, %s22, [#allocation4]
    $region5: #{tpu_custom_call.1} parent=1 // pred_fallthru
      _
    // Predicated region
    $region6: #{tpu_custom_call.1} parent=1 // pred_check
      _
    $region7: #{tpu_custom_call.1} parent=1 // pred_check_branch
      %26 = sbr.rel (0) target = $region9
    $region8: #{tpu_custom_call.1} parent=1 // pred_region
      %s27 = sadd.s32 0, 0
      %p28 = scmp.lt.s32.totalorder %s27, 0
      %s29 = scalar_select %p28, %s27, 0
      %s31 = ssub.s32 32, 32
      %32 = vsyncadd [#allocation7], %s31
      %s33 = smul.addr %s29, 32
      %s34 = scalar_lea.hbm %s1, %s33
      %s36 = sshll.u32 [#allocation6], 4
      %s37 = int_to_ptr.vmem [resolvable:$true] %s36
      %39 = dma.hbm_to_vmem [thread:$0]  %s34, 32, %s37, [#allocation7]
    $region9: #{tpu_custom_call.1} parent=1 // pred_fallthru
      _
    // Predicated region
    $region10: #{tpu_custom_call.1} parent=1 // pred_check
      _
    $region11: #{tpu_custom_call.1} parent=1 // pred_check_branch
      %41 = sbr.rel (0) target = $region13
    $region12: #{tpu_custom_call.1} parent=1 // pred_region
      %42 = dma.done [#allocation4], 32
    $region13: #{tpu_custom_call.1} parent=1 // pred_fallthru
      _
    // Predicated region
    $region14: #{tpu_custom_call.1} parent=1 // pred_check
      _
    $region15: #{tpu_custom_call.1} parent=1 // pred_check_branch
      %44 = sbr.rel (0) target = $region17
    $region16: #{tpu_custom_call.1} parent=1 // pred_region
      %45 = dma.done [#allocation7], 32
    $region17: #{tpu_custom_call.1} parent=1 // pred_fallthru
      _
    %s46 = sadd.s32 0, 0
    %p47 = scmp.lt.s32.totalorder %s46, 0
    %s48 = scalar_select %p47, %s46, 0
    %s49 = sadd.s32 0, 0
    %p50 = scmp.lt.s32.totalorder %s49, 0
    %s51 = scalar_select %p50, %s49, 0
    %p52 = scmp.eq.s32.totalorder 0, 0
    // Predicated region
    $region18: #{tpu_custom_call.1} parent=1 // pred_check
      %p53 = pneg %p52
    $region19: #{tpu_custom_call.1} parent=1 // pred_check_branch
      %55 = sbr.rel (%p53) target = $region21
    $region20: #{tpu_custom_call.1} parent=1 // pred_region
      %vm56 = vcmask 0
      %57 = vst.msk [vmem:[#allocation2] sm:$0x1] %vm56, 0.0
    $region21: #{tpu_custom_call.1} parent=1 // pred_fallthru
      _
    %v58 = vld [vmem:[#allocation3] sm:$0x3]
    %v59 = vld [vmem:[#allocation6] sm:$0x3]
    %v60 = vsub.f32 %v58, %v59
    %v61 = vadd.f32 %v60, 1e-06
    %v62 = vmul.f32 %v61, %v61
    %vm63 = vcmask 254976
    %v64 = vsel %vm63, %v62, 0.0
    %65 = vadd.xlane.f32.xlu0 %v64
    %v66 = vpop.xlane.xlu0 %65
    %v67 = vrsqrt.pop %v66
    %v68 = vmul.f32 %v66, %v67
    %vm69 = vcmp.eq.f32.partialorder %v66, inf
    %v70 = vsel %vm69, %v66, %v68
    %vm71 = vcmp.eq.f32.partialorder %v66, 0.0
    %v72 = vand.u32 %v66, 2147483648
    %v73 = vsel %vm71, %v72, %v70
    %v74 = vsub.f32 1e-06, %v60
    %v75 = vmul.f32 %v74, %v74
    %v76 = vsel %vm63, %v75, 0.0
    %77 = vadd.xlane.f32.xlu0 %v76
    %v78 = vpop.xlane.xlu0 %77
    %v79 = vrsqrt.pop %v78
    %v80 = vmul.f32 %v78, %v79
    %vm81 = vcmp.eq.f32.partialorder %v78, inf
    %v82 = vsel %vm81, %v78, %v80
    %vm83 = vcmp.eq.f32.partialorder %v78, 0.0
    %v84 = vand.u32 %v78, 2147483648
    %v85 = vsel %vm83, %v84, %v82
    %87 = vrot.lane.b32.xlu0 %v59, 96
    %v88 = vpop.permute.xlu0 %87
    %v90 = vsub.f32 %v58, %v88
    %v91 = vadd.f32 %v90, 1e-06
    %v92 = vmul.f32 %v91, %v91
    %v93 = vsel %vm63, %v92, 0.0
    %94 = vadd.xlane.f32.xlu0 %v93
    %v95 = vpop.xlane.xlu0 %94
    %v96 = vrsqrt.pop %v95
    %v97 = vmul.f32 %v95, %v96
    %vm98 = vcmp.eq.f32.partialorder %v95, inf
    %v99 = vsel %vm98, %v95, %v97
    %vm100 = vcmp.eq.f32.partialorder %v95, 0.0
    %v101 = vand.u32 %v95, 2147483648
    %v102 = vsel %vm100, %v101, %v99
    %104 = vrot.lane.b32.xlu0 %v58, 96
    %v105 = vpop.permute.xlu0 %104
    %v107 = vsub.f32 %v59, %v105
    %v108 = vadd.f32 %v107, 1e-06
    %v109 = vmul.f32 %v108, %v108
    %v110 = vsel %vm63, %v109, 0.0
    %111 = vadd.xlane.f32.xlu0 %v110
    %v112 = vpop.xlane.xlu0 %111
    %v113 = vrsqrt.pop %v112
    %v114 = vmul.f32 %v112, %v113
    %vm115 = vcmp.eq.f32.partialorder %v112, inf
    %v116 = vsel %vm115, %v112, %v114
    %vm117 = vcmp.eq.f32.partialorder %v112, 0.0
    %v118 = vand.u32 %v112, 2147483648
    %v119 = vsel %vm117, %v118, %v116
    %v120 = vsub.f32 %v73, %v102
    %v121 = vadd.f32 %v120, 1.0
    %v122 = vmax.f32 %v121, 0.0
    %v123 = vsub.f32 %v85, %v119
    %v124 = vadd.f32 %v123, 1.0
    %v125 = vmax.f32 %v124, 0.0
    %v126 = vadd.f32 %v122, %v125
    %s127 = sadd.s32 0, 0
    %s128 = smul.u32 %s127, 2
    %v129 = vlaneseq
    %v130 = vshrl.u32 %v129, 7
    %v131 = vstv %s128
    %v132 = vadd.s32 %v131, %v130
    %v133 = vld [vmem:[#allocation2] sm:$0x1]
    %vm134 = vcmp.lt.s32.totalorder %v132, 2
    %v135 = vsel %vm134, %v126, 0.0
    %vm136 = vcmask 1041408
    %v137 = vsel %vm136, %v135, 0.0
    %v138 = vrot.slane %v137, 4
    %v139 = vadd.f32 %v137, %v138
    %v140 = vrot.slane %v139, 2
    %v141 = vadd.f32 %v139, %v140
    %v142 = vrot.slane %v141, 1
    %v143 = vadd.f32 %v141, %v142
    %v144 = vadd.f32 %v133, %v143
    %vm145 = vcmask 0
    %146 = vst.msk [vmem:[#allocation2] sm:$0x1] %vm145, %v144
    // Predicated region
    $region22: #{tpu_custom_call.1} parent=1 // pred_check
      %p147 = pneg %p52
    $region23: #{tpu_custom_call.1} parent=1 // pred_check_branch
      %149 = sbr.rel (%p147) target = $region25
    $region24: #{tpu_custom_call.1} parent=1 // pred_region
      %v150 = vld [vmem:[#allocation2] sm:$0x1]
      %v151 = vmul.f32 %v150, 0.25
      %152 = vst.msk [vmem:[#allocation8] sm:$0x1] %vm145, %v151
    $region25: #{tpu_custom_call.1} parent=1 // pred_fallthru
      _
    // Predicated region
    $region26: #{tpu_custom_call.1} parent=1 // pred_check
      _
    $region27: #{tpu_custom_call.1} parent=1 // pred_check_branch
      %154 = sbr.rel (0) target = $region29
    $region28: #{tpu_custom_call.1} parent=1 // pred_region
      %s156 = ssub.s32 16, 16
      %157 = vsyncadd [#allocation5], %s156
      %s159 = sshll.u32 [#allocation8], 4
      %s160 = int_to_ptr.vmem [resolvable:$true] %s159
      %162 = dma.vmem_to_hbm [thread:$0]  %s160, 16, %s2, [#allocation5]
    $region29: #{tpu_custom_call.1} parent=1 // pred_fallthru
      _
    // Predicated region
    $region30: #{tpu_custom_call.1} parent=1 // pred_check
      _
    $region31: #{tpu_custom_call.1} parent=1 // pred_check_branch
      %164 = sbr.rel (0) target = $region33
    $region32: #{tpu_custom_call.1} parent=1 // pred_region
      %165 = dma.done [#allocation5], 16
    $region33: #{tpu_custom_call.1} parent=1 // pred_fallthru
      _
    %166 = vsyncpa [#allocation4], 1
    %167 = vsyncpa [#allocation7], 1
    %168 = vsyncpa [#allocation5], 1

</llo_original>
